<compile_context>
chip_gen: v5e
topology: v5e:2x2
jax: 0.10.0
libtpu: 0.0.40
codegen_flags: <defaults>
</compile_context>

<pallas_src>
import functools

import jax
import jax.numpy as jnp
from jax.experimental import pallas as pl
from jax.experimental.pallas import tpu as pltpu


def _round_up(x, m):
    return ((x + m - 1) // m) * m


def _ddne_dec_kernel(num_layers, mxu_dtype, *refs):
    """Fused DDNE decoder.

    refs = (x_ref, w0, b0, ..., w_{L-1}, b_{L-1}, o_ref, h_scratch)
    Grid = (batch tile i, final-layer column tile j).
    """
    x_ref = refs[0]
    o_ref = refs[-2]
    h_ref = refs[-1]
    params = refs[1:-2]

    j = pl.program_id(1)

    # Hidden stack: compute once per batch tile, cache in VMEM scratch (bf16).
    @pl.when(j == 0)
    def _():
        h = x_ref[...].astype(jnp.float32)
        for l in range(num_layers - 1):
            w = params[2 * l][...]                 # already mxu_dtype
            b = params[2 * l + 1][...]             # f32, shape (1, fan_out)
            z = jnp.dot(h.astype(mxu_dtype), w,
                        preferred_element_type=jnp.float32) + b
            # dropout (eval mode => identity), then relu
            h = jnp.maximum(z, 0.0)
        h_ref[...] = h.astype(h_ref.dtype)

    # Final layer: one lane-dense column block per j step, sigmoid epilogue.
    w_last = params[-2][...]                       # (d_hid_last, block_cols)
    b_last = params[-1][...]                       # (1, block_cols) f32
    logits = jnp.dot(h_ref[...], w_last,
                     preferred_element_type=jnp.float32) + b_last
    # sigmoid = exp (EUP) + approx reciprocal (EUP) -> VALU stays free.
    sig = pl.reciprocal(1.0 + jnp.exp(-logits), approx=True)
    o_ref[...] = sig.astype(o_ref.dtype)


def ddne_dec_forward(dyn_emb, weights, biases, *, block_rows=None,
                     block_cols=None, mxu_dtype=jnp.bfloat16):
    """DDNE decoder forward pass with a fused Pallas kernel.

    dyn_emb : (B, dec_dims[0]) float32
    weights : list of (dec_dims[l], dec_dims[l+1]) arrays (x @ W convention,
              i.e. transpose of PyTorch's (out, in) Linear weight)
    biases  : list of (1, dec_dims[l+1]) (or (dec_dims[l+1],)) arrays
    """
    num_layers = len(weights)
    B, d_in = dyn_emb.shape
    d_hid_last = weights[-1].shape[0]     # input width of the final layer
    d_out = weights[-1].shape[1]          # num_nodes

    # --- batch tiling (>=2 grid steps for large B, sublane aligned) --------
    if block_rows is None:
        block_rows = min(B, 256)
    if block_rows < B:
        block_rows = max(8, (block_rows // 8) * 8)
    else:
        block_rows = B
    n_row = pl.cdiv(B, block_rows)

    # --- output tiling: lane-dense stores, final-weight block <= ~2 MiB ----
    if block_cols is None:
        bytes_per_col = max(1, d_hid_last) * jnp.dtype(mxu_dtype).itemsize
        tgt = max(128, ((2 * 1024 * 1024) // bytes_per_col) // 128 * 128)
        block_cols = min(_round_up(d_out, 128), tgt, 2048)
    block_cols = _round_up(block_cols, 128)
    d_out_pad = _round_up(d_out, block_cols)
    n_col = d_out_pad // block_cols

    # --- parameter prep: bf16 weights (half the DMA), padded final layer ---
    w_hidden = [w.astype(mxu_dtype) for w in weights[:-1]]
    b_hidden = [jnp.reshape(b, (1, -1)).astype(jnp.float32) for b in biases[:-1]]
    w_last = jnp.zeros((d_hid_last, d_out_pad), mxu_dtype)
    w_last = w_last.at[:, :d_out].set(weights[-1].astype(mxu_dtype))
    b_last = jnp.zeros((1, d_out_pad), jnp.float32)
    b_last = b_last.at[:, :d_out].set(
        jnp.reshape(biases[-1], (1, d_out)).astype(jnp.float32))

    # --- BlockSpecs ---------------------------------------------------------
    in_specs = [pl.BlockSpec((block_rows, d_in), lambda i, j: (i, 0))]
    flat_params = []
    for w, b in zip(w_hidden, b_hidden):
        # constant index map -> double-buffering is pure VMEM waste.
        in_specs.append(pl.BlockSpec(w.shape, lambda i, j: (0, 0),
                                     pipeline_mode=pl.Buffered(1)))
        in_specs.append(pl.BlockSpec(b.shape, lambda i, j: (0, 0),
                                     pipeline_mode=pl.Buffered(1)))
        flat_params += [w, b]
    # final layer streamed by column block (default double buffering).
    in_specs.append(pl.BlockSpec((d_hid_last, block_cols), lambda i, j: (0, j)))
    in_specs.append(pl.BlockSpec((1, block_cols), lambda i, j: (0, j)))
    flat_params += [w_last, b_last]

    out_spec = pl.BlockSpec((block_rows, block_cols), lambda i, j: (i, j))

    # advisory cost estimate for XLA's scheduler
    flops = 2 * B * (sum(w.shape[0] * w.shape[1] for w in weights[:-1])
                     + d_hid_last * d_out_pad)
    bytes_accessed = (dyn_emb.size * dyn_emb.dtype.itemsize
                      + 4 * B * d_out_pad
                      + sum(p.size * p.dtype.itemsize for p in flat_params))
    cost = pl.CostEstimate(flops=flops, transcendentals=B * d_out_pad,
                           bytes_accessed=bytes_accessed)

    kernel = functools.partial(_ddne_dec_kernel, num_layers, mxu_dtype)

    out_padded = pl.pallas_call(
        kernel,
        out_shape=jax.ShapeDtypeStruct((B, d_out_pad), jnp.float32),
        grid_spec=pltpu.PrefetchScalarGridSpec(
            num_scalar_prefetch=0,
            grid=(n_row, n_col),
            in_specs=in_specs,
            out_specs=out_spec,
            scratch_shapes=[pltpu.VMEM((block_rows, d_hid_last), mxu_dtype)],
        ),
        compiler_params=pltpu.CompilerParams(
            dimension_semantics=("parallel", "arbitrary"),
            vmem_limit_bytes=48 * 1024 * 1024,
        ),
        cost_estimate=cost,
    )(dyn_emb, *flat_params)

    return out_padded[:, :d_out]


def init_ddne_dec_params(dec_dims, key):
    """Deterministic PyTorch-Linear-style init: U(-1/sqrt(in), 1/sqrt(in))."""
    weights, biases = [], []
    for l in range(len(dec_dims) - 1):
        fan_in, fan_out = dec_dims[l], dec_dims[l + 1]
        key, kw, kb = jax.random.split(key, 3)
        bound = 1.0 / jnp.sqrt(fan_in)
        # Stored as (in, out) == transpose of PyTorch's (out, in) weight.
        w = jax.random.uniform(kw, (fan_in, fan_out), jnp.float32, -bound, bound)
        b = jax.random.uniform(kb, (1, fan_out), jnp.float32, -bound, bound)
        weights.append(w)
        biases.append(b)
    return weights, biases


def ddne_dec_reference_f32(dyn_emb, weights, biases):
    """Plain-JAX f32 reference mirroring the PyTorch forward (eval mode)."""
    h = dyn_emb
    n = len(weights)
    for l in range(n - 1):
        h = jnp.maximum(h @ weights[l] + biases[l], 0.0)
    return jax.nn.sigmoid(h @ weights[-1] + biases[-1])


def ddne_dec_reference_mxu(dyn_emb, weights, biases, mxu_dtype=jnp.bfloat16):
    """Reference with the same bf16-in / f32-accumulate matmul precision."""
    h = dyn_emb.astype(jnp.float32)
    n = len(weights)
    for l in range(n):
        z = jnp.dot(h.astype(mxu_dtype), weights[l].astype(mxu_dtype),
                    preferred_element_type=jnp.float32)
        z = z + jnp.reshape(biases[l], (1, -1)).astype(jnp.float32)
        h = jnp.maximum(z, 0.0) if l < n - 1 else jax.nn.sigmoid(z)
    return h


if __name__ == "__main__":
    # dec_dims: embedding dim -> hidden -> num_nodes (small synthetic shapes)
    dec_dims = [32, 64, 16]
    dropout_rate = 0.2  # inference mode => identity
    batch = 8

    key = jax.random.PRNGKey(0)
    key, k_emb = jax.random.split(key)
    dyn_emb = jax.random.normal(k_emb, (batch, dec_dims[0]), jnp.float32)

    weights, biases = init_ddne_dec_params(dec_dims, key)

    adj_est = ddne_dec_forward(dyn_emb, weights, biases)
    adj_est = jax.block_until_ready(adj_est)
    assert adj_est.shape == (batch, dec_dims[-1])

    # matched-precision reference (bf16 MXU inputs, f32 accumulation)
    ref_mxu = ddne_dec_reference_mxu(dyn_emb, weights, biases)
    err_mxu = float(jnp.max(jnp.abs(adj_est - ref_mxu)))
    assert err_mxu < 5e-3, err_mxu

    # sanity check against the pure-f32 PyTorch-equivalent forward
    ref_f32 = ddne_dec_reference_f32(dyn_emb, weights, biases)
    err_f32 = float(jnp.max(jnp.abs(adj_est - ref_f32)))
    assert err_f32 < 5e-2, err_f32

    print("KERNEL_OK")
</pallas_src>

<mosaic_0001>
module attributes {stable_mosaic.version = 11 : i64} {
  func.func @_ddne_dec_kernel(%arg0: i32, %arg1: i32, %arg2: memref<8x32xf32, #tpu.memory_space<vmem>>, %arg3: memref<32x64xbf16, #tpu.memory_space<vmem>>, %arg4: memref<1x64xf32, #tpu.memory_space<vmem>>, %arg5: memref<64x128xbf16, #tpu.memory_space<vmem>>, %arg6: memref<1x128xf32, #tpu.memory_space<vmem>>, %arg7: memref<8x128xf32, #tpu.memory_space<vmem>>, %arg8: memref<8x64xbf16, #tpu.memory_space<vmem>>) attributes {dimension_semantics = [#tpu.dimension_semantics<parallel>, #tpu.dimension_semantics<arbitrary>], iteration_bounds = array<i64: 1, 1>, scalar_prefetch = 0 : i64, scratch_operands = 1 : i64, tpu.core_type = #tpu.core_type<tc>, window_params = [{transform_indices = @transform_0, window_bounds = array<i64: 8, 32>}, {pipeline_mode = #tpu.pipeline_mode<synchronous>, transform_indices = @transform_1, window_bounds = array<i64: 32, 64>}, {pipeline_mode = #tpu.pipeline_mode<synchronous>, transform_indices = @transform_2, window_bounds = array<i64: 1, 64>}, {transform_indices = @transform_3, window_bounds = array<i64: 64, 128>}, {transform_indices = @transform_4, window_bounds = array<i64: 1, 128>}, {transform_indices = @transform_5, window_bounds = array<i64: 8, 128>}]} {
    %c0_i32 = arith.constant 0 : i32
    %0 = arith.cmpi eq, %arg1, %c0_i32 : i32
    %1 = arith.extui %0 : i1 to i32
    %c0_i32_0 = arith.constant 0 : i32
    %2 = arith.cmpi ne, %1, %c0_i32_0 : i32
    scf.if %2 {
      %c0_10 = arith.constant 0 : index
      %c0_11 = arith.constant 0 : index
      %16 = vector.load %arg2[%c0_10, %c0_11] : memref<8x32xf32, #tpu.memory_space<vmem>>, vector<8x32xf32>
      %c0_12 = arith.constant 0 : index
      %c0_13 = arith.constant 0 : index
      %17 = vector.load %arg3[%c0_12, %c0_13] : memref<32x64xbf16, #tpu.memory_space<vmem>>, vector<32x64xbf16>
      %c0_14 = arith.constant 0 : index
      %c0_15 = arith.constant 0 : index
      %18 = vector.load %arg4[%c0_14, %c0_15] : memref<1x64xf32, #tpu.memory_space<vmem>>, vector<1x64xf32>
      %19 = arith.truncf %16 : vector<8x32xf32> to vector<8x32xbf16>
      %cst_16 = arith.constant dense<0.000000e+00> : vector<8x64xf32>
      %20 = tpu.matmul %19, %17, %cst_16 {dimension_numbers = #tpu.dot_dimension_numbers<[1], [0], [0], [1], [0, 0, 1, 1], [], []>} : vector<8x32xbf16>, vector<32x64xbf16>, vector<8x64xf32> -> vector<8x64xf32>
      %21 = vector.broadcast %18 : vector<1x64xf32> to vector<8x64xf32>
      %22 = arith.addf %20, %21 : vector<8x64xf32>
      %cst_17 = arith.constant 0.000000e+00 : f32
      %23 = vector.broadcast %cst_17 : f32 to vector<8x64xf32>
      %24 = arith.maximumf %22, %23 : vector<8x64xf32>
      %25 = arith.truncf %24 : vector<8x64xf32> to vector<8x64xbf16>
      %c0_18 = arith.constant 0 : index
      %c0_19 = arith.constant 0 : index
      %26 = vector.load %arg8[%c0_18, %c0_19] : memref<8x64xbf16, #tpu.memory_space<vmem>>, vector<8x64xbf16>
      tpu.vector_store %arg8[%c0_18, %c0_19], %25 {strides = array<i32>} : memref<8x64xbf16, #tpu.memory_space<vmem>>, vector<8x64xbf16>,
    } else {
    }
    %c0 = arith.constant 0 : index
    %c0_1 = arith.constant 0 : index
    %3 = vector.load %arg5[%c0, %c0_1] : memref<64x128xbf16, #tpu.memory_space<vmem>>, vector<64x128xbf16>
    %c0_2 = arith.constant 0 : index
    %c0_3 = arith.constant 0 : index
    %4 = vector.load %arg6[%c0_2, %c0_3] : memref<1x128xf32, #tpu.memory_space<vmem>>, vector<1x128xf32>
    %c0_4 = arith.constant 0 : index
    %c0_5 = arith.constant 0 : index
    %5 = vector.load %arg8[%c0_4, %c0_5] : memref<8x64xbf16, #tpu.memory_space<vmem>>, vector<8x64xbf16>
    %cst = arith.constant dense<0.000000e+00> : vector<8x128xf32>
    %6 = tpu.matmul %5, %3, %cst {dimension_numbers = #tpu.dot_dimension_numbers<[1], [0], [0], [1], [0, 0, 1, 1], [], []>} : vector<8x64xbf16>, vector<64x128xbf16>, vector<8x128xf32> -> vector<8x128xf32>
    %7 = vector.broadcast %4 : vector<1x128xf32> to vector<8x128xf32>
    %8 = arith.addf %6, %7 : vector<8x128xf32>
    %cst_6 = arith.constant 0.000000e+00 : f32
    %9 = vector.broadcast %cst_6 : f32 to vector<8x128xf32>
    %10 = arith.subf %9, %8 : vector<8x128xf32>
    %11 = math.exp %10 : vector<8x128xf32>
    %cst_7 = arith.constant 1.000000e+00 : f32
    %12 = vector.broadcast %cst_7 : f32 to vector<8x128xf32>
    %13 = arith.addf %12, %11 : vector<8x128xf32>
    %14 = tpu.reciprocal %13 {approx = true} : vector<8x128xf32> -> vector<8x128xf32>
    %c0_8 = arith.constant 0 : index
    %c0_9 = arith.constant 0 : index
    %15 = vector.load %arg7[%c0_8, %c0_9] : memref<8x128xf32, #tpu.memory_space<vmem>>, vector<8x128xf32>
    tpu.vector_store %arg7[%c0_8, %c0_9], %14 {strides = array<i32>} : memref<8x128xf32, #tpu.memory_space<vmem>>, vector<8x128xf32>,
    return
  }
  func.func @transform_0(%arg0: i32, %arg1: i32) -> (i32, i32) {
    %c0_i32 = arith.constant 0 : i32
    %c0_i32_0 = arith.constant 0 : i32
    return %arg0, %c0_i32 : i32, i32
  }
  func.func @transform_1(%arg0: i32, %arg1: i32) -> (i32, i32) {
    %c0_i32 = arith.constant 0 : i32
    %c0_i32_0 = arith.constant 0 : i32
    %c0_i32_1 = arith.constant 0 : i32
    return %c0_i32, %c0_i32_0 : i32, i32
  }
  func.func @transform_2(%arg0: i32, %arg1: i32) -> (i32, i32) {
    %c0_i32 = arith.constant 0 : i32
    %c0_i32_0 = arith.constant 0 : i32
    %c0_i32_1 = arith.constant 0 : i32
    return %c0_i32, %c0_i32_0 : i32, i32
  }
  func.func @transform_3(%arg0: i32, %arg1: i32) -> (i32, i32) {
    %c0_i32 = arith.constant 0 : i32
    %c0_i32_0 = arith.constant 0 : i32
    return %c0_i32, %arg1 : i32, i32
  }
  func.func @transform_4(%arg0: i32, %arg1: i32) -> (i32, i32) {
    %c0_i32 = arith.constant 0 : i32
    %c0_i32_0 = arith.constant 0 : i32
    return %c0_i32, %arg1 : i32, i32
  }
  func.func @transform_5(%arg0: i32, %arg1: i32) -> (i32, i32) {
    %c0_i32 = arith.constant 0 : i32
    return %arg0, %arg1 : i32, i32
  }
}

</mosaic_0001>

<llo_original>
// kernel: tpu_custom_call.1
$region0: #{tpu_custom_call.1}
  #allocation0 [shape = 'u32[]', space=smem, size = 0x4, offset = 0x4, fixed_abs, tag = 'smem constant byte address 0x4 - core index']
  #allocation1 [shape = 'u32[72,128]{1,0:T(1,128)}', space=vmem, size = 0x9000, scoped, tag = 'internal scratch']
  #allocation2 [shape = 'bf16[8,64]{1,0:T(8,128)(2,1)}', space=vmem, size = 0x800, scoped, tag = 'scratch operand']
  %s0 = inlined_call_operand.hbm [shape: f32[8,32], index: 0, kind: input, shape index: {}]
  %s1 = inlined_call_operand.hbm [shape: bf16[32,64], index: 1, kind: input, shape index: {}]
  %s2 = inlined_call_operand.vmem [shape: f32[1,64], index: 2, kind: input, shape index: {}]
  %s3 = inlined_call_operand.hbm [shape: bf16[64,128], index: 3, kind: input, shape index: {}]
  %s4 = inlined_call_operand.vmem [shape: f32[1,128], index: 4, kind: input, shape index: {}]
  %s5 = inlined_call_operand.hbm [shape: f32[8,128], index: 5, kind: output, shape index: {}]
  %s6 = sld [smem:[#allocation0]]
  $region46: #{tpu_custom_call.1} parent=0
    _
  %s8 = ssub.s32 1, %s6
  %s9 = scalar_select 0, %s8, %s6
  $region1: #{tpu_custom_call.1} parent=0
    #allocation3 [shape = 'u8[4096]{0}', space=vmem, size = 0x1000, scoped, tag = 'input window, operand 0, single buffered']
    #allocation4 [shape = 's32[1]{0}', space=sflag, size = 0x4, scoped, tag = 'scoped memory for tpu_custom_call.1']
    #allocation5 [shape = 's32[1]{0}', space=sflag, size = 0x4, scoped, tag = 'scoped memory for tpu_custom_call.1']
    #allocation6 [shape = 'u8[8192]{0}', space=vmem, size = 0x2000, scoped, tag = 'input window, operand 1, single buffered']
    #allocation7 [shape = 's32[1]{0}', space=sflag, size = 0x4, scoped, tag = 'scoped memory for tpu_custom_call.1']
    #allocation8 [shape = 'u8[16384]{0}', space=vmem, size = 0x4000, scoped, tag = 'input window, operand 3, single buffered']
    #allocation9 [shape = 'u8[4096]{0}', space=vmem, size = 0x1000, scoped, tag = 'output window, operand 0, single buffered']
    %10 = vsyncpa [#allocation4], 0
    %11 = vsyncpa [#allocation7], 0
    %12 = vsyncpa [#allocation5], 0
    // Predicated region
    $region2: #{tpu_custom_call.1} parent=1 // pred_check
      _
    $region3: #{tpu_custom_call.1} parent=1 // pred_check_branch
      %14 = sbr.rel (0) target = $region5
    $region4: #{tpu_custom_call.1} parent=1 // pred_region
      %16 = vsyncadd [#allocation4], 0
      %s18 = sshll.u32 %s0, 4
      %s19 = int_to_ptr.hbm [resolvable:$true] %s18
      %s20 = sshll.u32 [#allocation3], 4
      %s21 = int_to_ptr.vmem [resolvable:$true] %s20
      %23 = dma.hbm_to_vmem [thread:$0]  %s19, 128, %s21, [#allocation4]
    $region5: #{tpu_custom_call.1} parent=1 // pred_fallthru
      _
    // Predicated region
    $region6: #{tpu_custom_call.1} parent=1 // pred_check
      _
    $region7: #{tpu_custom_call.1} parent=1 // pred_check_branch
      %25 = sbr.rel (0) target = $region9
    $region8: #{tpu_custom_call.1} parent=1 // pred_region
      %27 = vsyncadd [#allocation7], 0
      %s28 = sshll.u32 %s1, 4
      %s29 = int_to_ptr.hbm [resolvable:$true] %s28
      %s30 = sshll.u32 [#allocation6], 4
      %s31 = int_to_ptr.vmem [resolvable:$true] %s30
      %36 = dma.hbm_to_vmem [thread:$0]  %s29, 256, %s31, [#allocation7], 64, 64, 4
    $region9: #{tpu_custom_call.1} parent=1 // pred_fallthru
      _
    // Predicated region
    $region10: #{tpu_custom_call.1} parent=1 // pred_check
      _
    $region11: #{tpu_custom_call.1} parent=1 // pred_check_branch
      %38 = sbr.rel (0) target = $region13
    $region12: #{tpu_custom_call.1} parent=1 // pred_region
      _
    $region13: #{tpu_custom_call.1} parent=1 // pred_fallthru
      _
    // Predicated region
    $region14: #{tpu_custom_call.1} parent=1 // pred_check
      _
    $region15: #{tpu_custom_call.1} parent=1 // pred_check_branch
      %40 = sbr.rel (0) target = $region17
    $region16: #{tpu_custom_call.1} parent=1 // pred_region
      %42 = vsyncadd [#allocation7], 0
      %s43 = sshll.u32 %s3, 4
      %s44 = int_to_ptr.hbm [resolvable:$true] %s43
      %s45 = sshll.u32 [#allocation8], 4
      %s46 = int_to_ptr.vmem [resolvable:$true] %s45
      %51 = dma.hbm_to_vmem [thread:$0]  %s44, 512, %s46, [#allocation7], 64, 64, 4
    $region17: #{tpu_custom_call.1} parent=1 // pred_fallthru
      _
    // Predicated region
    $region18: #{tpu_custom_call.1} parent=1 // pred_check
      _
    $region19: #{tpu_custom_call.1} parent=1 // pred_check_branch
      %53 = sbr.rel (0) target = $region21
    $region20: #{tpu_custom_call.1} parent=1 // pred_region
      _
    $region21: #{tpu_custom_call.1} parent=1 // pred_fallthru
      _
    // Predicated region
    $region22: #{tpu_custom_call.1} parent=1 // pred_check
      _
    $region23: #{tpu_custom_call.1} parent=1 // pred_check_branch
      %55 = sbr.rel (0) target = $region25
    $region24: #{tpu_custom_call.1} parent=1 // pred_region
      %57 = dma.done [#allocation4], 128
    $region25: #{tpu_custom_call.1} parent=1 // pred_fallthru
      _
    // Predicated region
    $region26: #{tpu_custom_call.1} parent=1 // pred_check
      _
    $region27: #{tpu_custom_call.1} parent=1 // pred_check_branch
      %59 = sbr.rel (0) target = $region29
    $region28: #{tpu_custom_call.1} parent=1 // pred_region
      %61 = dma.done [#allocation7], 256
    $region29: #{tpu_custom_call.1} parent=1 // pred_fallthru
      _
    // Predicated region
    $region30: #{tpu_custom_call.1} parent=1 // pred_check
      _
    $region31: #{tpu_custom_call.1} parent=1 // pred_check_branch
      %63 = sbr.rel (0) target = $region33
    $region32: #{tpu_custom_call.1} parent=1 // pred_region
      %65 = dma.done [#allocation7], 512
    $region33: #{tpu_custom_call.1} parent=1 // pred_fallthru
      _
    %p67 = scmp.eq.s32.totalorder 0, 0
    // Predicated region
    $region34: #{tpu_custom_call.1} parent=1 // pred_check
      %p68 = pneg %p67
    $region35: #{tpu_custom_call.1} parent=1 // pred_check_branch
      %70 = sbr.rel (%p68) target = $region37
    $region36: #{tpu_custom_call.1} parent=1 // pred_region
      %v71 = vld [vmem:[#allocation3] sm:$0xff]
      %v72 = vld [vmem:[#allocation6] sm:$0xf]
      %v73 = vld [vmem:[#allocation6 + $0x4] sm:$0xf]
      %v74 = vld [vmem:[#allocation6 + $0x8] sm:$0xf]
      %v75 = vld [vmem:[#allocation6 + $0xc] sm:$0xf]
      %v76 = vld [vmem:[%s2] sm:$0x1]
      %v77 = vpack.c.bf16 %v71, %v71
      %v79 = vperm.slane %v76, 0
      %v85 = vunpack.c.l.b16 %v72
      %v86 = vunpack.c.l.b16 %v73
      %v87 = vunpack.c.l.b16 %v74
      %v88 = vunpack.c.l.b16 %v75
      %v89 = vpack.c.b16 %v86, %v85
      %v90 = vpack.c.b16 %v88, %v87
      %vm93 = vcmask 261120
      %v95 = vsel %vm93, %v77, 0
      %97 = vmatpush.bf16.msra.mxu0 0
      %98 = vmatpush.bf16.msra.mxu0 0
      %99 = vmatpush.bf16.msra.mxu0 0
      %100 = vmatpush.bf16.msra.mxu0 0
      %101 = vmatpush.bf16.msra.mxu0 0
      %102 = vmatpush.bf16.msra.mxu0 0
      %103 = vmatpush.bf16.msra.mxu0 %v90
      %104 = vmatpush.bf16.msra.mxu0 %v89
      %105 = vmatmul.bf16.gmra.mxu0 %v95
      %v106 = vpop.f32.mrf.mxu0
      %v107 = vadd.f32 %v79, %v106
      %v108 = vpop.f32.mrf.mxu0
      %109 = vdwg.mxu0
      %v110 = vmax.f32 %v107, 0.0
      %v111 = vpack.c.bf16 %v110, %v110
      %vm112 = vcmask 519168
      %113 = vst.msk [vmem:[#allocation2] sm:$0xf] %vm112, %v111
    $region37: #{tpu_custom_call.1} parent=1 // pred_fallthru
      _
    %v114 = vld [vmem:[#allocation8] sm:$0xf]
    %v115 = vld [vmem:[#allocation8 + $0x4] sm:$0xf]
    %v116 = vld [vmem:[#allocation8 + $0x8] sm:$0xf]
    %v117 = vld [vmem:[#allocation8 + $0xc] sm:$0xf]
    %v118 = vld [vmem:[#allocation8 + $0x10] sm:$0xf]
    %v119 = vld [vmem:[#allocation8 + $0x14] sm:$0xf]
    %v120 = vld [vmem:[#allocation8 + $0x18] sm:$0xf]
    %v121 = vld [vmem:[#allocation8 + $0x1c] sm:$0xf]
    %v122 = vld [vmem:[%s4] sm:$0x1]
    %v123 = vld [vmem:[#allocation2] sm:$0xf]
    %v125 = vperm.slane %v122, 0
    %v135 = vunpack.c.l.b16 %v114
    %v136 = vunpack.c.l.b16 %v115
    %v137 = vunpack.c.l.b16 %v116
    %v138 = vunpack.c.l.b16 %v117
    %v139 = vunpack.c.l.b16 %v118
    %v140 = vunpack.c.l.b16 %v119
    %v141 = vunpack.c.l.b16 %v120
    %v142 = vunpack.c.l.b16 %v121
    %v143 = vpack.c.b16 %v136, %v135
    %v144 = vpack.c.b16 %v138, %v137
    %v145 = vpack.c.b16 %v140, %v139
    %v146 = vpack.c.b16 %v142, %v141
    %vm151 = vcmask 523264
    %v153 = vsel %vm151, %v123, 0
    %155 = vmatpush.bf16.msra.mxu0 0
    %156 = vmatpush.bf16.msra.mxu0 0
    %157 = vmatpush.bf16.msra.mxu0 0
    %158 = vmatpush.bf16.msra.mxu0 0
    %159 = vmatpush.bf16.msra.mxu0 %v146
    %160 = vmatpush.bf16.msra.mxu0 %v145
    %161 = vmatpush.bf16.msra.mxu0 %v144
    %162 = vmatpush.bf16.msra.mxu0 %v143
    %163 = vmatmul.bf16.gmra.mxu0 %v153
    %v164 = vpop.f32.mrf.mxu0
    %v165 = vadd.f32 %v125, %v164
    %v166 = vpop.f32.mrf.mxu0
    %167 = vdwg.mxu0
    %v168 = vsub.f32 0.0, %v165
    %v169 = vmul.f32 %v168, 1.442695
    %v170 = vpow.pop %v169
    %v171 = vadd.f32 %v170, 1.0
    %v172 = vrcp.pop %v171
    %173 = vst [vmem:[#allocation9] sm:$0xff] %v172
    // Predicated region
    $region38: #{tpu_custom_call.1} parent=1 // pred_check
      _
    $region39: #{tpu_custom_call.1} parent=1 // pred_check_branch
      %175 = sbr.rel (0) target = $region41
    $region40: #{tpu_custom_call.1} parent=1 // pred_region
      %177 = vsyncadd [#allocation5], 0
      %s179 = sshll.u32 [#allocation9], 4
      %s180 = int_to_ptr.vmem [resolvable:$true] %s179
      %s181 = sshll.u32 %s5, 4
      %s182 = int_to_ptr.hbm [resolvable:$true] %s181
      %184 = dma.vmem_to_hbm [thread:$0]  %s180, 128, %s182, [#allocation5]
    $region41: #{tpu_custom_call.1} parent=1 // pred_fallthru
      _
    // Predicated region
    $region42: #{tpu_custom_call.1} parent=1 // pred_check
      _
    $region43: #{tpu_custom_call.1} parent=1 // pred_check_branch
      %186 = sbr.rel (0) target = $region45
    $region44: #{tpu_custom_call.1} parent=1 // pred_region
      %188 = dma.done [#allocation5], 128
    $region45: #{tpu_custom_call.1} parent=1 // pred_fallthru
      _
    %189 = vsyncpa [#allocation4], 1
    %190 = vsyncpa [#allocation7], 1
    %191 = vsyncpa [#allocation5], 1

</llo_original>
